<compile_context>
chip_gen: v7x
topology: tpu7x:2x2x1
jax: 0.10.0
libtpu: 0.0.40
codegen_flags: <defaults>
</compile_context>

<pallas_src>
import math

import jax
import jax.numpy as jnp
from jax.experimental import pallas as pl
from jax.experimental.pallas import tpu as pltpu

EMBED_DIM = 10  # fixed in the PyTorch module


# ---------------------------------------------------------------------------
# Fused kernel: one grid step = TR adjacency rows x one lane-folded batch tile.
# ---------------------------------------------------------------------------
def _gcn_kernel(s_ref, t_ref, x_ref, w_ref, b_ref, o_ref):
    """
    s_ref : (TR, 10)            row block of source_embed
    t_ref : (10, N)             target_embed            (grid-invariant)
    x_ref : (N, Bt*Fin)         batch tile, batch folded into the lane axis
    w_ref : (Bt*Fin, Bt*Fout)   block-diag(W.T)         (grid-invariant)
    b_ref : (1, Bt*Fout)        bias tiled over batch   (grid-invariant)
    o_ref : (TR, Bt*Fout)       lane-dense output slab
    """
    # Learned adjacency rows, recomputed every step (cheap: EMBED_DIM-deep MXU
    # dot; exp goes to the EUP slot, row reductions to the XLU slot).
    logits = jnp.dot(s_ref[...], t_ref[...],
                     preferred_element_type=jnp.float32)        # (TR, N)
    logits = jnp.maximum(logits, 0.0)                           # relu
    m = jnp.max(logits, axis=1, keepdims=True)
    e = jnp.exp(logits - m)
    inv = pl.reciprocal(jnp.sum(e, axis=1, keepdims=True), approx=True)
    adj = e * inv                                               # row softmax

    # Aggregation over all N nodes for the whole batch tile: one MXU dot.
    agg = jnp.dot(adj, x_ref[...], preferred_element_type=jnp.float32)

    # Linear projection: block-diagonal weight keeps the lane-folded layout, so
    # this is also a single MXU dot; bias broadcast happens exactly once.
    out = jnp.dot(agg, w_ref[...], preferred_element_type=jnp.float32) + b_ref[...]
    o_ref[...] = out.astype(o_ref.dtype)


# ---------------------------------------------------------------------------
# Host-side (static-shape) tiling heuristics.
# ---------------------------------------------------------------------------
def _vmem_budget_bytes():
    """Scoped-VMEM budget derived from the actual chip when available
    (v5e/v6e: 128 MiB physical, v7x: 64 MiB); keep a 2x headroom."""
    try:
        cap = pltpu.get_tpu_info().vmem_capacity_bytes
    except Exception:
        cap = 64 * 1024 * 1024  # conservative: v7x physical
    return int(cap) // 2


def _pick_batch_tile(B, N, Fin, Fout, budget_bytes, lane_cap=1024):
    """Largest divisor Bt of B whose per-step f32 footprint fits the budget and
    whose folded lane width stays moderate (block-diag weight grows as Bt^2)."""
    best = 1
    for bt in range(1, B + 1):
        if B % bt:
            continue
        est = 4 * (2 * N * bt * Fin            # x slab (double-buffered)
                   + 2 * N * bt * Fout         # out slab (double-buffered)
                   + 2 * bt * Fin * bt * Fout  # block-diag weight
                   + N * N + N * bt * Fin)     # adj + agg temporaries (upper bound)
        if est <= budget_bytes and bt * max(Fin, Fout) <= lane_cap:
            best = bt
    return best


def _pick_row_tile(N, batch_grid_steps, cap=512):
    """Row-block size for the fused adjacency/aggregation.  Caps per-step VMEM
    for large N and, when the batch grid alone has <2 steps, splits rows so a
    v7x megacore ('parallel' axes) has at least 2 steps to shard."""
    if N % 8 != 0:
        return N                      # keep full rows (8-sublane rule)
    tr = min(N, cap)
    while N % tr:                     # largest multiple-of-8 divisor <= cap
        tr -= 8
    if batch_grid_steps < 2 and tr == N and N >= 16:
        tr = max(8, N // 2)
        while N % tr:
            tr -= 8
    return tr


# ---------------------------------------------------------------------------
# Wrapper: layout plumbing (slab fold / un-fold, block-diag weight) + pallas_call.
# ---------------------------------------------------------------------------
@jax.jit
def learned_gcn(x, source_embed, target_embed, weight, bias):
    B, N, Fin = x.shape
    Fout = weight.shape[0]

    budget = _vmem_budget_bytes()
    Bt = _pick_batch_tile(B, N, Fin, Fout, budget)   # batch elems folded per step
    GB = B // Bt                                     # batch grid steps
    TR = _pick_row_tile(N, GB)                       # adjacency rows per step
    NR = N // TR

    # ---- wrapper-side layout plumbing (pure XLA, outside the kernel) --------
    # x slab: (GB, N, Bt*Fin) with the batch tile folded into the lane axis.
    x_slab = (x.reshape(GB, Bt, N, Fin)
               .transpose(0, 2, 1, 3)
               .reshape(GB, N, Bt * Fin))
    # Block-diagonal linear weight keeps the slab layout through the projection.
    w_bd = jnp.kron(jnp.eye(Bt, dtype=weight.dtype), weight.T)  # (Bt*Fin, Bt*Fout)
    bias_slab = jnp.tile(bias, Bt).reshape(1, Bt * Fout)

    out_slab = pl.pallas_call(
        _gcn_kernel,
        out_shape=jax.ShapeDtypeStruct((GB, N, Bt * Fout), x.dtype),
        grid_spec=pltpu.PrefetchScalarGridSpec(
            num_scalar_prefetch=0,
            grid=(GB, NR),
            in_specs=[
                pl.BlockSpec((TR, EMBED_DIM), lambda g, r: (r, 0)),         # S rows
                pl.BlockSpec((EMBED_DIM, N), lambda g, r: (0, 0)),          # T (resident)
                pl.BlockSpec((None, N, Bt * Fin), lambda g, r: (g, 0, 0)),  # x slab
                pl.BlockSpec((Bt * Fin, Bt * Fout), lambda g, r: (0, 0)),   # blkdiag(W.T)
                pl.BlockSpec((1, Bt * Fout), lambda g, r: (0, 0)),          # bias slab
            ],
            out_specs=pl.BlockSpec((None, TR, Bt * Fout), lambda g, r: (g, r, 0)),
        ),
        compiler_params=pltpu.CompilerParams(
            dimension_semantics=("parallel", "parallel"),  # no cross-step state
            vmem_limit_bytes=budget,
        ),
    )(source_embed, target_embed, x_slab, w_bd, bias_slab)

    # Un-fold the lane-dense slab back to (B, N, Fout).
    return (out_slab.reshape(GB, N, Bt, Fout)
            .transpose(0, 2, 1, 3)
            .reshape(B, N, Fout))


# ---------------------------------------------------------------------------
# Pure-JAX reference + test driver.
# ---------------------------------------------------------------------------
def reference(x, source_embed, target_embed, weight, bias):
    logits = jnp.maximum(source_embed @ target_embed, 0.0)
    adj = jax.nn.softmax(logits, axis=1)
    agg = jnp.einsum("nm,bmf->bnf", adj, x)
    return jnp.einsum("bnf,gf->bng", agg, weight) + bias


if __name__ == "__main__":
    # Small shapes consistent with the module: node_num nodes, per-node features.
    batch = 2
    node_num = 16
    in_feature = 32
    out_feature = 32

    key = jax.random.PRNGKey(0)
    k_x, k_s, k_t, k_w, k_b = jax.random.split(key, 5)

    # Deterministic parameter init mirroring reset_parameters() / nn.Linear defaults.
    stdv = 1.0 / math.sqrt(node_num)
    source_embed = jax.random.uniform(
        k_s, (node_num, EMBED_DIM), jnp.float32, minval=-stdv, maxval=stdv)
    target_embed = jax.random.uniform(
        k_t, (EMBED_DIM, node_num), jnp.float32, minval=-stdv, maxval=stdv)

    lin_k = 1.0 / math.sqrt(in_feature)
    weight = jax.random.uniform(
        k_w, (out_feature, in_feature), jnp.float32, minval=-lin_k, maxval=lin_k)
    bias = jax.random.uniform(
        k_b, (out_feature,), jnp.float32, minval=-lin_k, maxval=lin_k)

    x = jax.random.normal(k_x, (batch, node_num, in_feature), jnp.float32)

    out = learned_gcn(x, source_embed, target_embed, weight, bias)
    out = jax.block_until_ready(out)

    ref = reference(x, source_embed, target_embed, weight, bias)
    assert out.shape == (batch, node_num, out_feature)
    # Tolerance accommodates the EUP approximate reciprocal used in the softmax
    # normalization (with approx=False the kernel matches to ~1e-6).
    assert jnp.allclose(out, ref, atol=5e-3, rtol=5e-3), "mismatch vs JAX reference"

    print("KERNEL_OK")
</pallas_src>

<mosaic_0001>
module attributes {stable_mosaic.version = 11 : i64} {
  func.func @_gcn_kernel(%arg0: i32, %arg1: i32, %arg2: memref<8x10xf32, #tpu.memory_space<vmem>>, %arg3: memref<10x16xf32, #tpu.memory_space<vmem>>, %arg4: memref<1x16x64xf32, #tpu.memory_space<vmem>>, %arg5: memref<64x64xf32, #tpu.memory_space<vmem>>, %arg6: memref<1x64xf32, #tpu.memory_space<vmem>>, %arg7: memref<1x8x64xf32, #tpu.memory_space<vmem>>) attributes {dimension_semantics = [#tpu.dimension_semantics<parallel>, #tpu.dimension_semantics<parallel>], iteration_bounds = array<i64: 1, 2>, scalar_prefetch = 0 : i64, scratch_operands = 0 : i64, tpu.core_type = #tpu.core_type<tc>, window_params = [{transform_indices = @transform_0, window_bounds = array<i64: 8, 10>}, {pipeline_mode = #tpu.pipeline_mode<synchronous>, transform_indices = @transform_1, window_bounds = array<i64: 10, 16>}, {transform_indices = @transform_2, window_bounds = array<i64: 1, 16, 64>}, {pipeline_mode = #tpu.pipeline_mode<synchronous>, transform_indices = @transform_3, window_bounds = array<i64: 64, 64>}, {pipeline_mode = #tpu.pipeline_mode<synchronous>, transform_indices = @transform_4, window_bounds = array<i64: 1, 64>}, {transform_indices = @transform_5, window_bounds = array<i64: 1, 8, 64>}]} {
    %c0 = arith.constant 0 : index
    %c0_0 = arith.constant 0 : index
    %0 = vector.load %arg2[%c0, %c0_0] : memref<8x10xf32, #tpu.memory_space<vmem>>, vector<8x10xf32>
    %c0_1 = arith.constant 0 : index
    %c0_2 = arith.constant 0 : index
    %1 = vector.load %arg3[%c0_1, %c0_2] : memref<10x16xf32, #tpu.memory_space<vmem>>, vector<10x16xf32>
    %cst = arith.constant dense<0.000000e+00> : vector<8x16xf32>
    %2 = tpu.matmul %0, %1, %cst {dimension_numbers = #tpu.dot_dimension_numbers<[1], [0], [0], [1], [0, 0, 1, 1], [], []>} : vector<8x10xf32>, vector<10x16xf32>, vector<8x16xf32> -> vector<8x16xf32>
    %cst_3 = arith.constant 0.000000e+00 : f32
    %3 = vector.broadcast %cst_3 : f32 to vector<8x16xf32>
    %4 = arith.maximumf %2, %3 : vector<8x16xf32>
    %cst_4 = arith.constant dense<0xFF800000> : vector<8xf32>
    %5 = vector.multi_reduction <maximumf>, %4, %cst_4 [1] : vector<8x16xf32> to vector<8xf32>
    %6 = vector.shape_cast %5 : vector<8xf32> to vector<8x1xf32>
    %7 = vector.broadcast %6 : vector<8x1xf32> to vector<8x16xf32>
    %8 = arith.subf %4, %7 : vector<8x16xf32>
    %9 = math.exp %8 : vector<8x16xf32>
    %cst_5 = arith.constant dense<0.000000e+00> : vector<8xf32>
    %10 = vector.multi_reduction <add>, %9, %cst_5 [1] : vector<8x16xf32> to vector<8xf32>
    %11 = vector.shape_cast %10 : vector<8xf32> to vector<8x1xf32>
    %12 = tpu.reciprocal %11 {approx = true} : vector<8x1xf32> -> vector<8x1xf32>
    %13 = vector.broadcast %12 : vector<8x1xf32> to vector<8x16xf32>
    %14 = arith.mulf %9, %13 : vector<8x16xf32>
    %c0_6 = arith.constant 0 : index
    %c0_7 = arith.constant 0 : index
    %c0_8 = arith.constant 0 : index
    %15 = vector.load %arg4[%c0_6, %c0_7, %c0_8] : memref<1x16x64xf32, #tpu.memory_space<vmem>>, vector<1x16x64xf32>
    %16 = vector.shape_cast %15 : vector<1x16x64xf32> to vector<16x64xf32>
    %cst_9 = arith.constant dense<0.000000e+00> : vector<8x64xf32>
    %17 = tpu.matmul %14, %16, %cst_9 {dimension_numbers = #tpu.dot_dimension_numbers<[1], [0], [0], [1], [0, 0, 1, 1], [], []>} : vector<8x16xf32>, vector<16x64xf32>, vector<8x64xf32> -> vector<8x64xf32>
    %c0_10 = arith.constant 0 : index
    %c0_11 = arith.constant 0 : index
    %18 = vector.load %arg5[%c0_10, %c0_11] : memref<64x64xf32, #tpu.memory_space<vmem>>, vector<64x64xf32>
    %cst_12 = arith.constant dense<0.000000e+00> : vector<8x64xf32>
    %19 = tpu.matmul %17, %18, %cst_12 {dimension_numbers = #tpu.dot_dimension_numbers<[1], [0], [0], [1], [0, 0, 1, 1], [], []>} : vector<8x64xf32>, vector<64x64xf32>, vector<8x64xf32> -> vector<8x64xf32>
    %c0_13 = arith.constant 0 : index
    %c0_14 = arith.constant 0 : index
    %20 = vector.load %arg6[%c0_13, %c0_14] : memref<1x64xf32, #tpu.memory_space<vmem>>, vector<1x64xf32>
    %21 = vector.broadcast %20 : vector<1x64xf32> to vector<8x64xf32>
    %22 = arith.addf %19, %21 : vector<8x64xf32>
    %c0_15 = arith.constant 0 : index
    %c0_16 = arith.constant 0 : index
    %c0_17 = arith.constant 0 : index
    %23 = vector.load %arg7[%c0_15, %c0_16, %c0_17] : memref<1x8x64xf32, #tpu.memory_space<vmem>>, vector<1x8x64xf32>
    %24 = vector.shape_cast %23 : vector<1x8x64xf32> to vector<8x64xf32>
    %25 = vector.shape_cast %22 : vector<8x64xf32> to vector<1x8x64xf32>
    tpu.vector_store %arg7[%c0_15, %c0_16, %c0_17], %25 {strides = array<i32>} : memref<1x8x64xf32, #tpu.memory_space<vmem>>, vector<1x8x64xf32>,
    return
  }
  func.func @transform_0(%arg0: i32, %arg1: i32) -> (i32, i32) {
    %c0_i32 = arith.constant 0 : i32
    %c0_i32_0 = arith.constant 0 : i32
    return %arg1, %c0_i32 : i32, i32
  }
  func.func @transform_1(%arg0: i32, %arg1: i32) -> (i32, i32) {
    %c0_i32 = arith.constant 0 : i32
    %c0_i32_0 = arith.constant 0 : i32
    %c0_i32_1 = arith.constant 0 : i32
    return %c0_i32, %c0_i32_0 : i32, i32
  }
  func.func @transform_2(%arg0: i32, %arg1: i32) -> (i32, i32, i32) {
    %c0_i32 = arith.constant 0 : i32
    %c0_i32_0 = arith.constant 0 : i32
    %c0_i32_1 = arith.constant 0 : i32
    return %arg0, %c0_i32, %c0_i32_0 : i32, i32, i32
  }
  func.func @transform_3(%arg0: i32, %arg1: i32) -> (i32, i32) {
    %c0_i32 = arith.constant 0 : i32
    %c0_i32_0 = arith.constant 0 : i32
    %c0_i32_1 = arith.constant 0 : i32
    return %c0_i32, %c0_i32_0 : i32, i32
  }
  func.func @transform_4(%arg0: i32, %arg1: i32) -> (i32, i32) {
    %c0_i32 = arith.constant 0 : i32
    %c0_i32_0 = arith.constant 0 : i32
    %c0_i32_1 = arith.constant 0 : i32
    return %c0_i32, %c0_i32_0 : i32, i32
  }
  func.func @transform_5(%arg0: i32, %arg1: i32) -> (i32, i32, i32) {
    %c0_i32 = arith.constant 0 : i32
    %c0_i32_0 = arith.constant 0 : i32
    return %arg0, %arg1, %c0_i32 : i32, i32, i32
  }
}

</mosaic_0001>

<llo_original>
// kernel: tile.8
$region0: #{tile.8}
  #allocation0 [shape = 's32[1]{0}', space=sflag, size = 0x4, scoped, tag = 'scoped memory for tile.8']
  %s0 = inlined_call_operand.vmem [shape: f32[32], index: 0, kind: input, shape index: {}]
  %s1 = inlined_call_operand.vmem [shape: f32[2,32], index: 1, kind: output, shape index: {}]
  // Predicated region
  $region2: #{tile.8} parent=0 // pred_check
    _
  $region3: #{tile.8} parent=0 // pred_check_branch
    %3 = sbr.rel (0) target = $region5
  $region4: #{tile.8} parent=0 // pred_region
    _
  $region5: #{tile.8} parent=0 // pred_fallthru
    _
  %v4 = vld [vmem:[%s0] ss:$0 sm:$0xff]
  %5 = vst [vmem:[%s1] sm:$0x3] %v4

// kernel: tile.9
$region0: #{tile.9}
  %s0 = inlined_call_operand.vmem [shape: f32[2,32], index: 0, kind: input, shape index: {}]
  %s1 = inlined_call_operand.vmem [shape: f32[1,64], index: 1, kind: output, shape index: {}]
  $region1: #{tile.9} parent=0
    #allocation0 [shape = 'u8[4096]{0}', space=vmem, size = 0x1000, scoped, tag = 'scoped mem for output reshape']
    #allocation1 [shape = 'u8[4096]{0}', space=vmem, size = 0x1000, scoped, tag = 'scoped mem for input reshape']
    %s3 = sshllo.u32 0, 2
    %v4 = vld [vmem:[%s0] sm:%s3]
    %5 = vst [vmem:[#allocation1] sm:%s3] %v4
    %v6 = vld [vmem:[#allocation1] sm:$0x1]
    %vm7 = vcmask 261120
    %8 = vst.msk [vmem:[#allocation0] sm:$0x1] %vm7, %v6
    %s9 = scalar_lea.vmem [#allocation1], 1
    %v10 = vld [vmem:[%s9] sm:$0x1]
    %11 = vrot.lane.b32.xlu0 %v10, 32
    %v12 = vpop.permute.xlu0 %11
    %vm13 = vcmask 523520
    %14 = vst.msk [vmem:[#allocation0] sm:$0x1] %vm13, %v12
    %s16 = sshllo.u32 0, 1
    %v18 = vld [vmem:[#allocation0] sm:%s16]
    %s19 = sshllo.u32 0, 1
    %20 = vst [vmem:[%s1] sm:%s19] %v18

// kernel: learned_gcn.1
$region0: #{learned_gcn.1}
  #allocation0 [shape = 'u32[]', space=smem, size = 0x4, offset = 0x4, fixed_abs, tag = 'smem constant byte address 0x4 - core index']
  #allocation1 [shape = 'u32[144,128]{1,0:T(1,128)}', space=vmem, size = 0x12000, scoped, tag = 'internal scratch']
  %s0 = inlined_call_operand.vmem [shape: f32[16,10], index: 0, kind: input, shape index: {}]
  %s1 = inlined_call_operand.vmem [shape: f32[10,16], index: 1, kind: input, shape index: {}]
  %s2 = inlined_call_operand.vmem [shape: f32[1,16,64], index: 2, kind: input, shape index: {}]
  %s3 = inlined_call_operand.vmem [shape: f32[64,64], index: 3, kind: input, shape index: {}]
  %s4 = inlined_call_operand.vmem [shape: f32[1,64], index: 4, kind: input, shape index: {}]
  %s5 = inlined_call_operand.vmem [shape: f32[1,16,64], index: 5, kind: output, shape index: {}]
  %s6 = sld [smem:[#allocation0]]
  $region53: #{learned_gcn.1} parent=0
    _
  %s8 = ssub.s32 1, %s6
  %s9 = scalar_select 0, %s8, %s6
  loop: start=0, step=1, limit=4
  $region2: #{learned_gcn.1} parent=0 // loop_pre_header
    _
  $region3: #{learned_gcn.1} parent=0 // loop_header
    %s11 = sphi 0, %s15
    %p12 = scmp.ge.s32.totalorder %s11, 4
    %s18 = sphi 0, %s30
    %s19 = sphi 0, %s26
    %s20 = sphi 0, %s18
    %s21 = sphi 0, %s19
    %s22 = sphi 0, %s20
    %s23 = sphi 0, %s21
    %s33 = sphi 0, %s35
    %s36 = sphi 0, %s33
    %s37 = sphi 0, %s36
    %s53 = sphi 0, %s37
    %s57 = sphi 0, %s57
    %s59 = sphi 0, %s57
    %s60 = sphi 0, %s59
    %s74 = sphi 0, %s60
    %s80 = sphi 0, %s82
    %s83 = sphi 0, %s80
    %s84 = sphi 0, %s83
    %s100 = sphi 0, %s84
    %s104 = sphi 0, %s104
    %s106 = sphi 0, %s104
    %s107 = sphi 0, %s106
    %s121 = sphi 0, %s107
    %s125 = sphi 0, %s125
    %s127 = sphi 0, %s125
    %s128 = sphi 0, %s127
    %s142 = sphi 0, %s128
    %s150 = sphi 0, %s152
    %s153 = sphi 0, %s150
    %s154 = sphi 0, %s153
    %s170 = sphi 0, %s154
  $region4: #{learned_gcn.1} parent=0 // loop_header_branch
    %14 = sbr.rel (%p12) target = $region8
  $region5: #{learned_gcn.1} parent=0 // loop_body
    %s16 = ssub.s32 %s11, 1
    %s17 = ssub.s32 %s11, 2
    %s24 = sadd.s32 1, %s19
    %p25 = scmp.ge.s32.totalorder %s24, 2
    %s26 = scalar_select %p25, 0, %s24
    %s27 = sadd.s32 1, %s18
    %s28 = scalar_select %p25, %s27, %s18
    %p29 = scmp.ge.s32.totalorder %s28, 1
    %s30 = scalar_select %p29, 0, %s28
    %s31 = ssub.s32 %s19, %s26
    %p32 = scmp.eq.s32.totalorder %s31, 0
    %s34 = sadd.s32 %s33, 1
    %s35 = scalar_select %p32, %s33, %s34
    %p38 = pneg %p32
    %p39 = scmp.eq.s32.totalorder %s11, 1
    %p40 = por %p38, %p39
    %p41 = scmp.ne.s32.totalorder %s33, %s36
    %p42 = scmp.eq.s32.totalorder %s11, 0
    %p43 = por %p41, %p42
    %p44 = scmp.ne.s32.totalorder %s33, %s36
    %p45 = scmp.eq.s32.totalorder %s16, 1
    %p46 = por %p44, %p45
    %p47 = scmp.ne.s32.totalorder %s36, %s37
    %p48 = scmp.eq.s32.totalorder %s16, 0
    %p49 = por %p47, %p48
    %p50 = scmp.ne.s32.totalorder %s36, %s37
    %p51 = scmp.eq.s32.totalorder %s17, 1
    %p52 = por %p50, %p51
    %p54 = scmp.ne.s32.totalorder %s37, %s53
    %p55 = scmp.eq.s32.totalorder %s17, 0
    %p56 = por %p54, %p55
    %s58 = sadd.s32 %s57, 1
    %p61 = scmp.eq.s32.totalorder %s11, 1
    %p62 = scmp.ne.s32.totalorder %s57, %s59
    %p63 = scmp.eq.s32.totalorder %s11, 0
    %p64 = por %p62, %p63
    %p65 = scmp.ne.s32.totalorder %s57, %s59
    %p66 = scmp.eq.s32.totalorder %s16, 1
    %p67 = por %p65, %p66
    %p68 = scmp.ne.s32.totalorder %s59, %s60
    %p69 = scmp.eq.s32.totalorder %s16, 0
    %p70 = por %p68, %p69
    %p71 = scmp.ne.s32.totalorder %s59, %s60
    %p72 = scmp.eq.s32.totalorder %s17, 1
    %p73 = por %p71, %p72
    %p75 = scmp.ne.s32.totalorder %s60, %s74
    %p76 = scmp.eq.s32.totalorder %s17, 0
    %p77 = por %p75, %p76
    %s78 = ssub.s32 %s18, %s30
    %p79 = scmp.eq.s32.totalorder %s78, 0
    %s81 = sadd.s32 %s80, 1
    %s82 = scalar_select %p79, %s80, %s81
    %p85 = pneg %p79
    %p86 = scmp.eq.s32.totalorder %s11, 1
    %p87 = por %p85, %p86
    %p88 = scmp.ne.s32.totalorder %s80, %s83
    %p89 = scmp.eq.s32.totalorder %s11, 0
    %p90 = por %p88, %p89
    %p91 = scmp.ne.s32.totalorder %s80, %s83
    %p92 = scmp.eq.s32.totalorder %s16, 1
    %p93 = por %p91, %p92
    %p94 = scmp.ne.s32.totalorder %s83, %s84
    %p95 = scmp.eq.s32.totalorder %s16, 0
    %p96 = por %p94, %p95
    %p97 = scmp.ne.s32.totalorder %s83, %s84
    %p98 = scmp.eq.s32.totalorder %s17, 1
    %p99 = por %p97, %p98
    %p101 = scmp.ne.s32.totalorder %s84, %s100
    %p102 = scmp.eq.s32.totalorder %s17, 0
    %p103 = por %p101, %p102
    %s105 = sadd.s32 %s104, 1
    %p108 = scmp.eq.s32.totalorder %s11, 1
    %p109 = scmp.ne.s32.totalorder %s104, %s106
    %p110 = scmp.eq.s32.totalorder %s11, 0
    %p111 = por %p109, %p110
    %p112 = scmp.ne.s32.totalorder %s104, %s106
    %p113 = scmp.eq.s32.totalorder %s16, 1
    %p114 = por %p112, %p113
    %p115 = scmp.ne.s32.totalorder %s106, %s107
    %p116 = scmp.eq.s32.totalorder %s16, 0
    %p117 = por %p115, %p116
    %p118 = scmp.ne.s32.totalorder %s106, %s107
    %p119 = scmp.eq.s32.totalorder %s17, 1
    %p120 = por %p118, %p119
    %p122 = scmp.ne.s32.totalorder %s107, %s121
    %p123 = scmp.eq.s32.totalorder %s17, 0
    %p124 = por %p122, %p123
    %s126 = sadd.s32 %s125, 1
    %p129 = scmp.eq.s32.totalorder %s11, 1
    %p130 = scmp.ne.s32.totalorder %s125, %s127
    %p131 = scmp.eq.s32.totalorder %s11, 0
    %p132 = por %p130, %p131
    %p133 = scmp.ne.s32.totalorder %s125, %s127
    %p134 = scmp.eq.s32.totalorder %s16, 1
    %p135 = por %p133, %p134
    %p136 = scmp.ne.s32.totalorder %s127, %s128
    %p137 = scmp.eq.s32.totalorder %s16, 0
    %p138 = por %p136, %p137
    %p139 = scmp.ne.s32.totalorder %s127, %s128
    %p140 = scmp.eq.s32.totalorder %s17, 1
    %p141 = por %p139, %p140
    %p143 = scmp.ne.s32.totalorder %s128, %s142
    %p144 = scmp.eq.s32.totalorder %s17, 0
    %p145 = por %p143, %p144
    %s146 = ssub.s32 %s18, %s30
    %s147 = ssub.s32 %s19, %s26
    %s148 = sor.u32 %s146, %s147
    %p149 = scmp.eq.s32.totalorder %s148, 0
    %s151 = sadd.s32 %s150, 1
    %s152 = scalar_select %p149, %s150, %s151
    %p155 = pneg %p149
    %p156 = scmp.eq.s32.totalorder %s11, 1
    %p157 = por %p155, %p156
    %p158 = scmp.ne.s32.totalorder %s150, %s153
    %p159 = scmp.eq.s32.totalorder %s11, 0
    %p160 = por %p158, %p159
    %p161 = scmp.ne.s32.totalorder %s150, %s153
    %p162 = scmp.eq.s32.totalorder %s16, 1
    %p163 = por %p161, %p162
    %p164 = scmp.ne.s32.totalorder %s153, %s154
    %p165 = scmp.eq.s32.totalorder %s16, 0
    %p166 = por %p164, %p165
    %p167 = scmp.ne.s32.totalorder %s153, %s154
    %p168 = scmp.eq.s32.totalorder %s17, 1
    %p169 = por %p167, %p168
    %p171 = scmp.ne.s32.totalorder %s154, %s170
    %p172 = scmp.eq.s32.totalorder %s17, 0
    %p173 = por %p171, %p172
    %p174 = scmp.le.s32.totalorder 1, %s11
    %p175 = scmp.lt.s32.totalorder %s11, 3
    %p176 = pnand %p174, %p175
    %p177 = pneg %p176
    // Predicated region
    $region9: #{learned_gcn.1} parent=5 // pred_check
      _
    $region10: #{learned_gcn.1} parent=5 // pred_check_branch
      %179 = sbr.rel (%p176) target = $region12
    $region11: #{learned_gcn.1} parent=5 // pred_region
      %s180 = ssub.s32 %s11, 1
      // Predicated region
      $region13: #{learned_gcn.1} parent=11 // pred_check
        %p181 = pneg %p70
      $region14: #{learned_gcn.1} parent=11 // pred_check_branch
        %183 = sbr.rel (%p181) target = $region16
      $region15: #{learned_gcn.1} parent=11 // pred_region
        _
      $region16: #{learned_gcn.1} parent=11 // pred_fallthru
        _
      // Predicated region
      $region17: #{learned_gcn.1} parent=11 // pred_check
        %p184 = pneg %p96
      $region18: #{learned_gcn.1} parent=11 // pred_check_branch
        %186 = sbr.rel (%p184) target = $region20
      $region19: #{learned_gcn.1} parent=11 // pred_region
        %p187 = scmp.lt.s32.totalorder %s20, 0
        %s188 = scalar_select %p187, %s20, 0
        %s189 = smul.addr %s188, 2
        %s190 = smul.addr %s189, 8
        %s191 = scalar_lea.vmem %s2, %s190
      $region20: #{learned_gcn.1} parent=11 // pred_fallthru
        _
      // Predicated region
      $region21: #{learned_gcn.1} parent=11 // pred_check
        %p192 = pneg %p117
      $region22: #{learned_gcn.1} parent=11 // pred_check_branch
        %194 = sbr.rel (%p192) target = $region24
      $region23: #{learned_gcn.1} parent=11 // pred_region
        _
      $region24: #{learned_gcn.1} parent=11 // pred_fallthru
        _
      // Predicated region
      $region25: #{learned_gcn.1} parent=11 // pred_check
        %p195 = pneg %p138
      $region26: #{learned_gcn.1} parent=11 // pred_check_branch
        %197 = sbr.rel (%p195) target = $region28
      $region27: #{learned_gcn.1} parent=11 // pred_region
        _
      $region28: #{learned_gcn.1} parent=11 // pred_fallthru
        _
    $region12: #{learned_gcn.1} parent=5 // pred_fallthru
      _
    %p198 = scmp.lt.s32.totalorder %s11, 2
    // Predicated region
    $region29: #{learned_gcn.1} parent=5 // pred_check
      %p199 = pneg %p198
    $region30: #{learned_gcn.1} parent=5 // pred_check_branch
      %201 = sbr.rel (%p199) target = $region32
    $region31: #{learned_gcn.1} parent=5 // pred_region
      // Predicated region
      $region33: #{learned_gcn.1} parent=31 // pred_check
        %p202 = pneg %p43
      $region34: #{learned_gcn.1} parent=31 // pred_check_branch
        %204 = sbr.rel (%p202) target = $region36
      $region35: #{learned_gcn.1} parent=31 // pred_region
        %p205 = scmp.lt.s32.totalorder %s19, 1
        %s206 = scalar_select %p205, %s19, 1
        %s207 = smul.addr %s206, 8
        %s208 = scalar_lea.vmem %s0, %s207
      $region36: #{learned_gcn.1} parent=31 // pred_fallthru
        _
    $region32: #{learned_gcn.1} parent=5 // pred_fallthru
      _
    %p209 = scmp.le.s32.totalorder 1, %s11
    %p210 = scmp.lt.s32.totalorder %s11, 3
    %p211 = pnand %p209, %p210
    %p212 = pneg %p211
    // Predicated region
    $region37: #{learned_gcn.1} parent=5 // pred_check
      _
    $region38: #{learned_gcn.1} parent=5 // pred_check_branch
      %214 = sbr.rel (%p211) target = $region40
    $region39: #{learned_gcn.1} parent=5 // pred_region
      %s215 = ssub.s32 %s11, 1
      %p216 = scmp.lt.s32.totalorder %s21, 1
      %s217 = scalar_select %p216, %s21, 1
      %s218 = smul.addr %s217, 8
      %s219 = scalar_lea.vmem %s0, %s218
      %p220 = pneg %p49
      %p221 = pneg %p46
      %p222 = pneg %p70
      %p223 = pneg %p67
      %p224 = scmp.lt.s32.totalorder %s20, 0
      %s225 = scalar_select %p224, %s20, 0
      %s226 = smul.addr %s225, 2
      %s227 = smul.addr %s226, 8
      %s228 = scalar_lea.vmem %s2, %s227
      %p229 = pneg %p96
      %p230 = pneg %p93
      %p231 = pneg %p117
      %p232 = pneg %p114
      %p233 = pneg %p138
      %p234 = pneg %p135
      %p235 = pneg %p166
      %p236 = pneg %p163
      %p237 = scmp.lt.s32.totalorder %s20, 0
      %s238 = scalar_select %p237, %s20, 0
      %p239 = scmp.lt.s32.totalorder %s21, 1
      %s240 = scalar_select %p239, %s21, 1
      %s241 = smul.addr %s238, 2
      %s242 = sadd.s32 %s240, %s241
      %s243 = smul.addr %s242, 8
      %s244 = scalar_lea.vmem %s5, %s243
      %p245 = scmp.lt.s32.totalorder %s21, 1
      %s246 = scalar_select %p245, %s21, 1
      %s247 = smul.addr %s246, 8
      %s248 = scalar_lea.vmem %s0, %s247
      %p249 = scmp.lt.s32.totalorder %s20, 0
      %s250 = scalar_select %p249, %s20, 0
      %s251 = smul.addr %s250, 2
      %s252 = smul.addr %s251, 8
      %s253 = scalar_lea.vmem %s2, %s252
      %p254 = scmp.lt.s32.totalorder %s20, 0
      %s255 = scalar_select %p254, %s20, 0
      %p256 = scmp.lt.s32.totalorder %s21, 1
      %s257 = scalar_select %p256, %s21, 1
      %s258 = smul.addr %s255, 2
      %s259 = sadd.s32 %s257, %s258
      %s260 = smul.addr %s259, 8
      %s261 = scalar_lea.vmem %s5, %s260
      %v262 = vld [vmem:[%s248] sm:$0xff]
      %v263 = vld [vmem:[%s1] sm:$0xff]
      %v264 = vld [vmem:[%s1 + $0x8] sm:$0x3]
      %vm265 = vcmask 80896
      %v267 = vsel %vm265, %v262, 0
      %vm269 = vcmask 1041408
      %v271 = vsel %vm269, %v264, 0
      %273 = vmatprep.subr.mxu0 0.0
      %274 = vmatpush1.msra.mxu0 %v263
      %275 = vmatprep.subr.mxu0 0.0
      %276 = vmatpush1.msra.mxu0 %v271
      %277 = vmatprep.subr.mxu0 0.0
      %278 = vmatpush1.msra.mxu0 0.0
      %279 = vmatprep.subr.mxu0 0.0
      %280 = vmatpush1.msra.mxu0 0.0
      %281 = vmatprep.subr.mxu0 0.0
      %282 = vmatpush1.msra.mxu0 0.0
      %283 = vmatprep.subr.mxu0 0.0
      %284 = vmatpush1.msra.mxu0 0.0
      %285 = vmatprep.subr.mxu0 0.0
      %286 = vmatpush1.msra.mxu0 0.0
      %287 = vmatprep.subr.mxu0 0.0
      %288 = vmatpush1.msra.mxu0 0.0
      %289 = vmatprep.subr.mxu0 0.0
      %290 = vmatpush1.msra.mxu0 0.0
      %291 = vmatprep.subr.mxu0 0.0
      %292 = vmatpush1.msra.mxu0 0.0
      %293 = vmatprep.subr.mxu0 0.0
      %294 = vmatpush1.msra.mxu0 0.0
      %295 = vmatprep.subr.mxu0 0.0
      %296 = vmatpush1.msra.mxu0 0.0
      %297 = vmatprep.subr.mxu0 0.0
      %298 = vmatpush1.msra.mxu0 0.0
      %299 = vmatprep.subr.mxu0 0.0
      %300 = vmatpush1.msra.mxu0 0.0
      %301 = vmatprep.subr.mxu0 0.0
      %302 = vmatpush1.msra.mxu0 0.0
      %303 = vmatprep.subr.mxu0 0.0
      %304 = vmatpush1.msra.mxu0 0.0
      %305 = vmatprep.subr.mxu0 0.0
      %306 = vmatpush1.msra.mxu0 0.0
      %307 = vmatprep.subr.mxu0 0.0
      %308 = vmatpush1.msra.mxu0 0.0
      %309 = vmatprep.subr.mxu0 0.0
      %310 = vmatpush1.msra.mxu0 0.0
      %311 = vmatprep.subr.mxu0 0.0
      %312 = vmatpush1.msra.mxu0 0.0
      %313 = vmatprep.subr.mxu0 0.0
      %314 = vmatpush1.msra.mxu0 0.0
      %315 = vmatprep.subr.mxu0 0.0
      %316 = vmatpush1.msra.mxu0 0.0
      %317 = vmatprep.subr.mxu0 0.0
      %318 = vmatpush1.msra.mxu0 0.0
      %319 = vmatprep.subr.mxu0 0.0
      %320 = vmatpush1.msra.mxu0 0.0
      %321 = vmatprep.subr.mxu0 0.0
      %322 = vmatpush1.msra.mxu0 0.0
      %323 = vmatprep.subr.mxu0 0.0
      %324 = vmatpush1.msra.mxu0 0.0
      %325 = vmatprep.subr.mxu0 0.0
      %326 = vmatpush1.msra.mxu0 0.0
      %327 = vmatprep.subr.mxu0 0.0
      %328 = vmatpush1.msra.mxu0 0.0
      %329 = vmatprep.subr.mxu0 0.0
      %330 = vmatpush1.msra.mxu0 0.0
      %331 = vmatprep.subr.mxu0 0.0
      %332 = vmatpush1.msra.mxu0 0.0
      %333 = vmatprep.subr.mxu0 0.0
      %334 = vmatpush1.msra.mxu0 0.0
      %335 = vmatprep.subr.mxu0 0.0
      %336 = vmatpush1.msra.mxu0 0.0
      %337 = vmatprep.mubr.f32.mxu0 0.0
      %338 = vmatmul.mubr.f32.gmra.mrb[0].mxu0 %v267
      %v339 = vpop.f32.mrb[0].mxu0
      %v340 = vadd.f32 0.0, %v339
      %v341 = vpop.f32.mrb[0].mxu0
      %342 = vdwg.mxu0
      %v343 = vmax.f32 %v340, 0.0
      %vm344 = vcmask 130048
      %v345 = vsel %vm344, %v343, -inf
      %346 = vmax.xlane.f32.xlu0 %v345
      %v347 = vpop.xlane.xlu0 %346
      %v348 = vsub.f32 %v343, %v347
      %v349 = vmul.f32 %v348, 1.442695
      %v350 = vpow.pop %v349
      %v351 = vsel %vm344, %v350, 0.0
      %352 = vadd.xlane.f32.xlu0 %v351
      %v353 = vpop.xlane.xlu0 %352
      %v354 = vrcp.pop %v353
      %v355 = vmul.f32 %v350, %v354
      %v356 = vld [vmem:[%s253] sm:$0xff]
      %v357 = vld [vmem:[%s253 + $0x8] sm:$0xff]
      %v359 = vsel %vm344, %v355, 0
      %361 = vmatprep.subr.mxu0 0.0
      %362 = vmatpush1.msra.mxu0 %v356
      %363 = vmatprep.subr.mxu0 0.0
      %364 = vmatpush1.msra.mxu0 %v357
      %365 = vmatprep.subr.mxu0 0.0
      %366 = vmatpush1.msra.mxu0 0.0
      %367 = vmatprep.subr.mxu0 0.0
      %368 = vmatpush1.msra.mxu0 0.0
      %369 = vmatprep.subr.mxu0 0.0
      %370 = vmatpush1.msra.mxu0 0.0
      %371 = vmatprep.subr.mxu0 0.0
      %372 = vmatpush1.msra.mxu0 0.0
      %373 = vmatprep.subr.mxu0 0.0
      %374 = vmatpush1.msra.mxu0 0.0
      %375 = vmatprep.subr.mxu0 0.0
      %376 = vmatpush1.msra.mxu0 0.0
      %377 = vmatprep.subr.mxu0 0.0
      %378 = vmatpush1.msra.mxu0 0.0
      %379 = vmatprep.subr.mxu0 0.0
      %380 = vmatpush1.msra.mxu0 0.0
      %381 = vmatprep.subr.mxu0 0.0
      %382 = vmatpush1.msra.mxu0 0.0
      %383 = vmatprep.subr.mxu0 0.0
      %384 = vmatpush1.msra.mxu0 0.0
      %385 = vmatprep.subr.mxu0 0.0
      %386 = vmatpush1.msra.mxu0 0.0
      %387 = vmatprep.subr.mxu0 0.0
      %388 = vmatpush1.msra.mxu0 0.0
      %389 = vmatprep.subr.mxu0 0.0
      %390 = vmatpush1.msra.mxu0 0.0
      %391 = vmatprep.subr.mxu0 0.0
      %392 = vmatpush1.msra.mxu0 0.0
      %393 = vmatprep.subr.mxu0 0.0
      %394 = vmatpush1.msra.mxu0 0.0
      %395 = vmatprep.subr.mxu0 0.0
      %396 = vmatpush1.msra.mxu0 0.0
      %397 = vmatprep.subr.mxu0 0.0
      %398 = vmatpush1.msra.mxu0 0.0
      %399 = vmatprep.subr.mxu0 0.0
      %400 = vmatpush1.msra.mxu0 0.0
      %401 = vmatprep.subr.mxu0 0.0
      %402 = vmatpush1.msra.mxu0 0.0
      %403 = vmatprep.subr.mxu0 0.0
      %404 = vmatpush1.msra.mxu0 0.0
      %405 = vmatprep.subr.mxu0 0.0
      %406 = vmatpush1.msra.mxu0 0.0
      %407 = vmatprep.subr.mxu0 0.0
      %408 = vmatpush1.msra.mxu0 0.0
      %409 = vmatprep.subr.mxu0 0.0
      %410 = vmatpush1.msra.mxu0 0.0
      %411 = vmatprep.subr.mxu0 0.0
      %412 = vmatpush1.msra.mxu0 0.0
      %413 = vmatprep.subr.mxu0 0.0
      %414 = vmatpush1.msra.mxu0 0.0
      %415 = vmatprep.subr.mxu0 0.0
      %416 = vmatpush1.msra.mxu0 0.0
      %417 = vmatprep.subr.mxu0 0.0
      %418 = vmatpush1.msra.mxu0 0.0
      %419 = vmatprep.subr.mxu0 0.0
      %420 = vmatpush1.msra.mxu0 0.0
      %421 = vmatprep.subr.mxu0 0.0
      %422 = vmatpush1.msra.mxu0 0.0
      %423 = vmatprep.subr.mxu0 0.0
      %424 = vmatpush1.msra.mxu0 0.0
      %425 = vmatprep.mubr.f32.mxu0 0.0
      %426 = vmatmul.mubr.f32.gmra.mrb[0].mxu0 %v359
      %v427 = vpop.f32.mrb[0].mxu0
      %v428 = vadd.f32 0.0, %v427
      %v429 = vpop.f32.mrb[0].mxu0
      %430 = vdwg.mxu0
      %v431 = vld [vmem:[%s3] sm:$0xff]
      %v432 = vld [vmem:[%s3 + $0x8] sm:$0xff]
      %v433 = vld [vmem:[%s3 + $0x10] sm:$0xff]
      %v434 = vld [vmem:[%s3 + $0x18] sm:$0xff]
      %v435 = vld [vmem:[%s3 + $0x20] sm:$0xff]
      %v436 = vld [vmem:[%s3 + $0x28] sm:$0xff]
      %v437 = vld [vmem:[%s3 + $0x30] sm:$0xff]
      %v438 = vld [vmem:[%s3 + $0x38] sm:$0xff]
      %v439 = vld [vmem:[%s4] sm:$0x1]
      %v441 = vlaneseq
      %v442 = vshrl.u32 %v441, 7
      %v443 = vsub.s32 0, %v442
      %v444 = vrot.slane %v439, %v443
      %vm446 = vcmask 523264
      %v448 = vsel %vm446, %v428, 0
      %450 = vmatprep.subr.mxu0 0.0
      %451 = vmatpush1.msra.mxu0 %v431
      %452 = vmatprep.subr.mxu0 0.0
      %453 = vmatpush1.msra.mxu0 %v432
      %454 = vmatprep.subr.mxu0 0.0
      %455 = vmatpush1.msra.mxu0 %v433
      %456 = vmatprep.subr.mxu0 0.0
      %457 = vmatpush1.msra.mxu0 %v434
      %458 = vmatprep.subr.mxu0 0.0
      %459 = vmatpush1.msra.mxu0 %v435
      %460 = vmatprep.subr.mxu0 0.0
      %461 = vmatpush1.msra.mxu0 %v436
      %462 = vmatprep.subr.mxu0 0.0
      %463 = vmatpush1.msra.mxu0 %v437
      %464 = vmatprep.subr.mxu0 0.0
      %465 = vmatpush1.msra.mxu0 %v438
      %466 = vmatprep.subr.mxu0 0.0
      %467 = vmatpush1.msra.mxu0 0.0
      %468 = vmatprep.subr.mxu0 0.0
      %469 = vmatpush1.msra.mxu0 0.0
      %470 = vmatprep.subr.mxu0 0.0
      %471 = vmatpush1.msra.mxu0 0.0
      %472 = vmatprep.subr.mxu0 0.0
      %473 = vmatpush1.msra.mxu0 0.0
      %474 = vmatprep.subr.mxu0 0.0
      %475 = vmatpush1.msra.mxu0 0.0
      %476 = vmatprep.subr.mxu0 0.0
      %477 = vmatpush1.msra.mxu0 0.0
      %478 = vmatprep.subr.mxu0 0.0
      %479 = vmatpush1.msra.mxu0 0.0
      %480 = vmatprep.subr.mxu0 0.0
      %481 = vmatpush1.msra.mxu0 0.0
      %482 = vmatprep.subr.mxu0 0.0
      %483 = vmatpush1.msra.mxu0 0.0
      %484 = vmatprep.subr.mxu0 0.0
      %485 = vmatpush1.msra.mxu0 0.0
      %486 = vmatprep.subr.mxu0 0.0
      %487 = vmatpush1.msra.mxu0 0.0
      %488 = vmatprep.subr.mxu0 0.0
      %489 = vmatpush1.msra.mxu0 0.0
      %490 = vmatprep.subr.mxu0 0.0
      %491 = vmatpush1.msra.mxu0 0.0
      %492 = vmatprep.subr.mxu0 0.0
      %493 = vmatpush1.msra.mxu0 0.0
      %494 = vmatprep.subr.mxu0 0.0
      %495 = vmatpush1.msra.mxu0 0.0
      %496 = vmatprep.subr.mxu0 0.0
      %497 = vmatpush1.msra.mxu0 0.0
      %498 = vmatprep.subr.mxu0 0.0
      %499 = vmatpush1.msra.mxu0 0.0
      %500 = vmatprep.subr.mxu0 0.0
      %501 = vmatpush1.msra.mxu0 0.0
      %502 = vmatprep.subr.mxu0 0.0
      %503 = vmatpush1.msra.mxu0 0.0
      %504 = vmatprep.subr.mxu0 0.0
      %505 = vmatpush1.msra.mxu0 0.0
      %506 = vmatprep.subr.mxu0 0.0
      %507 = vmatpush1.msra.mxu0 0.0
      %508 = vmatprep.subr.mxu0 0.0
      %509 = vmatpush1.msra.mxu0 0.0
      %510 = vmatprep.subr.mxu0 0.0
      %511 = vmatpush1.msra.mxu0 0.0
      %512 = vmatprep.subr.mxu0 0.0
      %513 = vmatpush1.msra.mxu0 0.0
      %514 = vmatprep.mubr.f32.mxu0 0.0
      %515 = vmatmul.mubr.f32.gmra.mrb[0].mxu0 %v448
      %v516 = vpop.f32.mrb[0].mxu0
      %v517 = vadd.f32 %v444, %v516
      %v518 = vpop.f32.mrb[0].mxu0
      %519 = vdwg.mxu0
      %520 = vst.msk [vmem:[%s261] sm:$0xff] %vm446, %v517
      %p521 = scmp.lt.s32.totalorder %s20, 0
      %s522 = scalar_select %p521, %s20, 0
      %p523 = scmp.lt.s32.totalorder %s21, 1
      %s524 = scalar_select %p523, %s21, 1
      %s525 = smul.addr %s522, 2
      %s526 = sadd.s32 %s524, %s525
      %s527 = smul.addr %s526, 8
      %s528 = scalar_lea.vmem %s5, %s527
      // Predicated region
      $region41: #{learned_gcn.1} parent=39 // pred_check
        %p529 = pneg %p163
      $region42: #{learned_gcn.1} parent=39 // pred_check_branch
        %531 = sbr.rel (%p529) target = $region44
      $region43: #{learned_gcn.1} parent=39 // pred_region
        _
      $region44: #{learned_gcn.1} parent=39 // pred_fallthru
        _
    $region40: #{learned_gcn.1} parent=5 // pred_fallthru
      _
    %p532 = scmp.le.s32.totalorder 2, %s11
    // Predicated region
    $region45: #{learned_gcn.1} parent=5 // pred_check
      %p533 = pneg %p532
    $region46: #{learned_gcn.1} parent=5 // pred_check_branch
      %535 = sbr.rel (%p533) target = $region48
    $region47: #{learned_gcn.1} parent=5 // pred_region
      %s536 = ssub.s32 %s11, 2
      // Predicated region
      $region49: #{learned_gcn.1} parent=47 // pred_check
        %p537 = pneg %p169
      $region50: #{learned_gcn.1} parent=47 // pred_check_branch
        %539 = sbr.rel (%p537) target = $region52
      $region51: #{learned_gcn.1} parent=47 // pred_region
        %p540 = scmp.lt.s32.totalorder %s22, 0
        %s541 = scalar_select %p540, %s22, 0
        %p542 = scmp.lt.s32.totalorder %s23, 1
        %s543 = scalar_select %p542, %s23, 1
        %s544 = smul.addr %s541, 2
        %s545 = sadd.s32 %s543, %s544
        %s546 = smul.addr %s545, 8
        %s547 = scalar_lea.vmem %s5, %s546
      $region52: #{learned_gcn.1} parent=47 // pred_fallthru
        _
    $region48: #{learned_gcn.1} parent=5 // pred_fallthru
      _
  $region6: #{learned_gcn.1} parent=0 // loop_footer
    %s15 = sadd.s32 1, %s11
  $region7: #{learned_gcn.1} parent=0 // loop_footer_branch
    %10 = sbr.rel target = $region3
  $region8: #{learned_gcn.1} parent=0 // loop_exit
    _

</llo_original>
